<compile_context>
chip_gen: v6e
topology: v6e:2x2x1
jax: 0.10.0
libtpu: 0.0.40
codegen_flags: <defaults>
</compile_context>

<pallas_src>
import functools

import numpy as np
import jax
import jax.numpy as jnp
from jax import lax
from jax.experimental import pallas as pl
from jax.experimental.pallas import tpu as pltpu


# ----------------------------------------------------------------------------
# Static geometry (buffers of the PyTorch module, built deterministically)
# ----------------------------------------------------------------------------
def _round_up(n: int, m: int) -> int:
    return ((n + m - 1) // m) * m


def build_ico_faces(subdivisions: int) -> np.ndarray:
    # TODO(synk): exact get_ico_faces() connectivity is an external helper not
    # provided; use a deterministic triangulation of the unfolded
    # (5*2^s) x 2^(s+1) vertex grid plus the two pole vertices instead.
    H = 5 * (2 ** subdivisions)
    W = 2 ** (subdivisions + 1)
    n_grid = H * W
    north, south = n_grid, n_grid + 1
    idx = lambda r, c: r * W + c
    faces = []
    for r in range(H - 1):
        for c in range(W - 1):
            v00, v01 = idx(r, c), idx(r, c + 1)
            v10, v11 = idx(r + 1, c), idx(r + 1, c + 1)
            faces.append((v00, v01, v11))
            faces.append((v00, v11, v10))
    for c in range(W - 1):
        faces.append((north, idx(0, c), idx(0, c + 1)))
        faces.append((south, idx(H - 1, c + 1), idx(H - 1, c)))
    return np.asarray(faces, dtype=np.int32)


def build_vertex_neighbor_index(vert_len: int, faces: np.ndarray):
    """(V, max_deg) neighbor table (sentinel = V -> extra zero column) + 1/deg."""
    nbrs = [set() for _ in range(vert_len)]
    for f in faces:
        a, b, c = int(f[0]), int(f[1]), int(f[2])
        nbrs[a].update((b, c))
        nbrs[b].update((a, c))
        nbrs[c].update((a, b))
    max_deg = max(len(s) for s in nbrs)
    idx = np.full((vert_len, max_deg), vert_len, dtype=np.int32)
    inv_deg = np.zeros((vert_len,), dtype=np.float32)
    for i, s in enumerate(nbrs):
        lst = sorted(s)
        idx[i, :len(lst)] = lst
        inv_deg[i] = 1.0 / max(len(lst), 1)
    return idx, inv_deg


def build_vertex_face_index(vert_len: int, faces: np.ndarray) -> np.ndarray:
    """(V, max_fdeg) incident-face table, padded with sentinel F (zero column)."""
    incident = [[] for _ in range(vert_len)]
    for fi, f in enumerate(faces):
        for k in range(3):
            incident[int(f[k])].append(fi)
    max_deg = max(len(l) for l in incident)
    F = faces.shape[0]
    idx = np.full((vert_len, max_deg), F, dtype=np.int32)
    for vi, l in enumerate(incident):
        idx[vi, :len(l)] = l
    return idx


# ----------------------------------------------------------------------------
# Plane-major (C, B, V) geometry glue (plain JAX; bounded-degree gathers).
# TODO(synk): for very large meshes these gathers could be moved in-kernel via
# scalar-prefetched index tables + DMA gather instead of XLA gathers.
# ----------------------------------------------------------------------------
def compute_vertex_normals_planes(v, faces, vf_idx):
    """Unnormalized area-weighted vertex normals; v, result: (3, B, V).

    The in-kernel cosine term is invariant to positive per-vertex scaling, so
    skipping the final normalization is equivalent to normalized normals.
    """
    # TODO(synk): exact external compute_vertex_normals convention is unknown.
    p0 = v[:, :, faces[:, 0]]
    p1 = v[:, :, faces[:, 1]]
    p2 = v[:, :, faces[:, 2]]
    fn = jnp.cross(p1 - p0, p2 - p0, axis=0)                          # (3,B,F)
    fn_ext = jnp.concatenate(
        [fn, jnp.zeros(fn.shape[:2] + (1,), fn.dtype)], axis=-1)      # sentinel col
    vn = jnp.zeros_like(v)
    for k in range(vf_idx.shape[1]):                                  # accumulate in place:
        vn = vn + jnp.take(fn_ext, vf_idx[:, k], axis=2)              # no (...,max_deg) temp
    return vn


def compute_laplacian_planes(v, nbr_idx, inv_deg):
    """Uniform graph laplacian lap_i = v_i - mean_{j in N(i)} v_j; (3, B, V)."""
    v_ext = jnp.concatenate(
        [v, jnp.zeros(v.shape[:2] + (1,), v.dtype)], axis=-1)         # sentinel col
    nbr_sum = jnp.zeros_like(v)
    for k in range(nbr_idx.shape[1]):
        nbr_sum = nbr_sum + jnp.take(v_ext, nbr_idx[:, k], axis=2)
    return v - nbr_sum * inv_deg[None, None, :]


# ----------------------------------------------------------------------------
# Fused Pallas kernel: position MSE + cosine + laplacian MSE + KLD partials
# ----------------------------------------------------------------------------
def _p2pkld_kernel(pred_ref, tgt_ref, mu_ref, lv_ref, out_ref, *,
                   batch, vert_len):
    inv_n3 = 1.0 / float(batch * vert_len * 3)   # MSELoss denominators (true counts)
    inv_n1 = 1.0 / float(batch * vert_len)

    # --- position MSE: planes 0..2 (padded lanes are zero in both operands) ---
    d0 = pred_ref[0] - tgt_ref[0]
    d1 = pred_ref[1] - tgt_ref[1]
    d2 = pred_ref[2] - tgt_ref[2]
    pos_p = jnp.sum(d0 * d0 + d1 * d1 + d2 * d2) * inv_n3

    # --- cosine on normals: planes 3..5, pure VPU adds + rsqrt (EUP) ---
    vx, vy, vz = pred_ref[3], pred_ref[4], pred_ref[5]
    tx, ty, tz = tgt_ref[3], tgt_ref[4], tgt_ref[5]
    dot = vx * tx + vy * ty + vz * tz
    na2 = vx * vx + vy * vy + vz * vz
    nb2 = tx * tx + ty * ty + tz * tz
    # torch CosineSimilarity(eps=1e-8): clamp in squared space; rsqrt instead of
    # sqrt+reciprocal (avoids na2*nb2 overflow). Padded lanes: dot=0 -> cos=0.
    cos = (dot * lax.rsqrt(jnp.maximum(na2, 1e-16))
               * lax.rsqrt(jnp.maximum(nb2, 1e-16)))
    cos_p = jnp.sum(cos) * inv_n1

    # --- laplacian MSE: planes 6..8 ---
    l0 = pred_ref[6] - tgt_ref[6]
    l1 = pred_ref[7] - tgt_ref[7]
    l2 = pred_ref[8] - tgt_ref[8]
    lap_p = jnp.sum(l0 * l0 + l1 * l1 + l2 * l2) * inv_n3

    # --- KLD: reference does mean over latent then mean over batch, which is a
    #     global mean for equal row lengths.  Counted once (grid tile 0). ---
    mu = mu_ref[...]
    lv = lv_ref[...]
    kld_full = -0.5 * jnp.mean(1.0 + lv - mu * mu - jnp.exp(lv))
    kld_p = jnp.where(pl.program_id(0) == 0, kld_full, 0.0)

    # Lane-dense (4, 128) partial-sum block; summed over tiles in the wrapper.
    row = lax.broadcasted_iota(jnp.int32, (4, 128), 0)
    out_ref[0] = jnp.where(row == 0, pos_p,
                 jnp.where(row == 1, cos_p,
                 jnp.where(row == 2, lap_p, kld_p)))


def _p2pkld_terms(pred, tgt, mu2, lv2, *, batch, vert_len, lane_tile):
    C, B, Vp = pred.shape
    num_tiles = Vp // lane_tile
    kernel = functools.partial(_p2pkld_kernel, batch=batch, vert_len=vert_len)
    out = pl.pallas_call(
        kernel,
        out_shape=jax.ShapeDtypeStruct((num_tiles, 4, 128), jnp.float32),
        grid=(num_tiles,),
        in_specs=[
            pl.BlockSpec((C, B, lane_tile), lambda i: (0, 0, i)),
            pl.BlockSpec((C, B, lane_tile), lambda i: (0, 0, i)),
            pl.BlockSpec(mu2.shape, lambda i: (0, 0)),
            pl.BlockSpec(lv2.shape, lambda i: (0, 0)),
        ],
        out_specs=pl.BlockSpec((1, 4, 128), lambda i: (i, 0, 0)),
        compiler_params=pltpu.CompilerParams(
            dimension_semantics=("parallel",)),
    )(pred, tgt, mu2, lv2)
    # (num_tiles, 4) lane-0 partials -> (4,) totals
    return jnp.sum(out[:, :, 0], axis=0)


# ----------------------------------------------------------------------------
# Full P2PKLD_Loss forward
# ----------------------------------------------------------------------------
def p2pkld_loss(output, target, *, subdivisions,
                factor_pos, factor_nor, factor_lap, factor_kl,
                lane_tile=1024):
    recon, mu, logvar = output
    B = recon.shape[0]
    base = 2 ** subdivisions
    H = 5 * base
    W = 2 * base

    faces = build_ico_faces(subdivisions)
    vert_len = int(faces.max()) + 1
    nbr_idx, inv_deg = build_vertex_neighbor_index(vert_len, faces)
    vf_idx = build_vertex_face_index(vert_len, faces)

    # Lane tiling of the vertex axis (tile is a multiple of 128).
    lt = min(_round_up(vert_len, 128), lane_tile)
    Vp = _round_up(vert_len, lt)

    # ---- vertex positions from NCHW map + poles (channel-plane-major) ----
    top_y = np.arange(5) * base
    bot_y = np.arange(1, 6) * base - 1
    corner_y = np.stack([top_y, bot_y]).astype(np.int32)              # (2, 5)
    corner_x = np.stack([np.zeros(1, np.int32),
                         np.full(1, W - 1, dtype=np.int32)])          # (2, 1)

    x = recon.astype(jnp.float32)
    poles = jnp.mean(x[:, :, corner_y, corner_x], axis=-1)            # (B, 3, 2)
    v = jnp.concatenate([x.reshape(B, 3, H * W), poles], axis=2)      # (B, 3, V)
    v = jnp.transpose(v, (1, 0, 2))                                   # (3, B, V)

    vn = compute_vertex_normals_planes(v, faces, vf_idx)              # (3, B, V)
    lap = compute_laplacian_planes(v, nbr_idx, inv_deg)               # (3, B, V)

    # ---- pack plane-major: single (9, B, Vp) pred / target buffers ----
    pred = jnp.pad(jnp.concatenate([v, vn, lap], axis=0),
                   ((0, 0), (0, 0), (0, Vp - vert_len)))
    tgt = jnp.pad(jnp.transpose(target.astype(jnp.float32), (1, 0, 2)),
                  ((0, 0), (0, 0), (0, Vp - vert_len)))

    mu2 = mu.reshape(B, -1).astype(jnp.float32)
    lv2 = logvar.reshape(B, -1).astype(jnp.float32)

    terms = _p2pkld_terms(pred, tgt, mu2, lv2,
                          batch=B, vert_len=vert_len, lane_tile=lt)
    mse_pos, cos_mean, mse_lap, kld_raw = terms[0], terms[1], terms[2], terms[3]

    loss_cos = 1.0 - cos_mean
    # factor_kl is a static Python hyperparameter; mirrors `if self.factor_kl:`.
    kld = kld_raw if factor_kl else jnp.float32(0.0)
    recons_loss = (factor_pos * mse_pos
                   + factor_nor * loss_cos
                   + factor_lap * mse_lap)
    return recons_loss + factor_kl * kld


# ----------------------------------------------------------------------------
if __name__ == "__main__":
    key = jax.random.PRNGKey(0)
    subdivisions = 1
    B = 2
    H = 5 * (2 ** subdivisions)          # 10
    W = 2 ** (subdivisions + 1)          # 4
    V = H * W + 2                        # 42 vertices
    latent = 32

    k1, k2, k3, k4 = jax.random.split(key, 4)
    recon = jax.random.normal(k1, (B, 3, H, W), dtype=jnp.float32)
    mu = 0.1 * jax.random.normal(k2, (B, latent), dtype=jnp.float32)
    logvar = 0.1 * jax.random.normal(k3, (B, latent), dtype=jnp.float32)
    target = jax.random.normal(k4, (B, 9, V), dtype=jnp.float32)

    loss_fn = jax.jit(functools.partial(
        p2pkld_loss, subdivisions=subdivisions,
        factor_pos=1.0, factor_nor=0.5, factor_lap=0.3, factor_kl=0.01))
    loss = jax.block_until_ready(loss_fn((recon, mu, logvar), target))
    assert bool(jnp.isfinite(loss)), "loss is not finite"
    print("KERNEL_OK")
</pallas_src>

<mosaic_0001>
module attributes {stable_mosaic.version = 11 : i64} {
  func.func @_p2pkld_kernel(%arg0: i32, %arg1: memref<9x2x128xf32, #tpu.memory_space<vmem>>, %arg2: memref<9x2x128xf32, #tpu.memory_space<vmem>>, %arg3: memref<2x32xf32, #tpu.memory_space<vmem>>, %arg4: memref<2x32xf32, #tpu.memory_space<vmem>>, %arg5: memref<1x4x128xf32, #tpu.memory_space<vmem>>) attributes {dimension_semantics = [#tpu.dimension_semantics<parallel>], iteration_bounds = array<i64: 1>, scalar_prefetch = 0 : i64, scratch_operands = 0 : i64, tpu.core_type = #tpu.core_type<tc>, window_params = [{transform_indices = @transform_0, window_bounds = array<i64: 9, 2, 128>}, {transform_indices = @transform_1, window_bounds = array<i64: 9, 2, 128>}, {pipeline_mode = #tpu.pipeline_mode<synchronous>, transform_indices = @transform_2, window_bounds = array<i64: 2, 32>}, {pipeline_mode = #tpu.pipeline_mode<synchronous>, transform_indices = @transform_3, window_bounds = array<i64: 2, 32>}, {transform_indices = @transform_4, window_bounds = array<i64: 1, 4, 128>}]} {
    %c0 = arith.constant 0 : index
    %c0_0 = arith.constant 0 : index
    %c0_1 = arith.constant 0 : index
    %0 = vector.load %arg1[%c0, %c0_0, %c0_1] : memref<9x2x128xf32, #tpu.memory_space<vmem>>, vector<1x2x128xf32>
    %1 = vector.shape_cast %0 : vector<1x2x128xf32> to vector<2x128xf32>
    %c0_2 = arith.constant 0 : index
    %c0_3 = arith.constant 0 : index
    %c0_4 = arith.constant 0 : index
    %2 = vector.load %arg2[%c0_2, %c0_3, %c0_4] : memref<9x2x128xf32, #tpu.memory_space<vmem>>, vector<1x2x128xf32>
    %3 = vector.shape_cast %2 : vector<1x2x128xf32> to vector<2x128xf32>
    %4 = arith.subf %1, %3 : vector<2x128xf32>
    %c1 = arith.constant 1 : index
    %c0_5 = arith.constant 0 : index
    %c0_6 = arith.constant 0 : index
    %5 = vector.load %arg1[%c1, %c0_5, %c0_6] : memref<9x2x128xf32, #tpu.memory_space<vmem>>, vector<1x2x128xf32>
    %6 = vector.shape_cast %5 : vector<1x2x128xf32> to vector<2x128xf32>
    %c1_7 = arith.constant 1 : index
    %c0_8 = arith.constant 0 : index
    %c0_9 = arith.constant 0 : index
    %7 = vector.load %arg2[%c1_7, %c0_8, %c0_9] : memref<9x2x128xf32, #tpu.memory_space<vmem>>, vector<1x2x128xf32>
    %8 = vector.shape_cast %7 : vector<1x2x128xf32> to vector<2x128xf32>
    %9 = arith.subf %6, %8 : vector<2x128xf32>
    %c2 = arith.constant 2 : index
    %c0_10 = arith.constant 0 : index
    %c0_11 = arith.constant 0 : index
    %10 = vector.load %arg1[%c2, %c0_10, %c0_11] : memref<9x2x128xf32, #tpu.memory_space<vmem>>, vector<1x2x128xf32>
    %11 = vector.shape_cast %10 : vector<1x2x128xf32> to vector<2x128xf32>
    %c2_12 = arith.constant 2 : index
    %c0_13 = arith.constant 0 : index
    %c0_14 = arith.constant 0 : index
    %12 = vector.load %arg2[%c2_12, %c0_13, %c0_14] : memref<9x2x128xf32, #tpu.memory_space<vmem>>, vector<1x2x128xf32>
    %13 = vector.shape_cast %12 : vector<1x2x128xf32> to vector<2x128xf32>
    %14 = arith.subf %11, %13 : vector<2x128xf32>
    %15 = arith.mulf %4, %4 : vector<2x128xf32>
    %16 = arith.mulf %9, %9 : vector<2x128xf32>
    %17 = arith.addf %15, %16 : vector<2x128xf32>
    %18 = arith.mulf %14, %14 : vector<2x128xf32>
    %19 = arith.addf %17, %18 : vector<2x128xf32>
    %20 = vector.shape_cast %19 : vector<2x128xf32> to vector<1x2x128xf32>
    %cst = arith.constant dense<0.000000e+00> : vector<1xf32>
    %21 = vector.multi_reduction <add>, %20, %cst [1, 2] : vector<1x2x128xf32> to vector<1xf32>
    %22 = vector.shape_cast %21 : vector<1xf32> to vector<1x1x1xf32>
    %23 = vector.extract %22[0, 0, 0] : f32 from vector<1x1x1xf32>
    %cst_15 = arith.constant 0.0039682542 : f32
    %24 = arith.mulf %23, %cst_15 : f32
    %c3 = arith.constant 3 : index
    %c0_16 = arith.constant 0 : index
    %c0_17 = arith.constant 0 : index
    %25 = vector.load %arg1[%c3, %c0_16, %c0_17] : memref<9x2x128xf32, #tpu.memory_space<vmem>>, vector<1x2x128xf32>
    %26 = vector.shape_cast %25 : vector<1x2x128xf32> to vector<2x128xf32>
    %c4 = arith.constant 4 : index
    %c0_18 = arith.constant 0 : index
    %c0_19 = arith.constant 0 : index
    %27 = vector.load %arg1[%c4, %c0_18, %c0_19] : memref<9x2x128xf32, #tpu.memory_space<vmem>>, vector<1x2x128xf32>
    %28 = vector.shape_cast %27 : vector<1x2x128xf32> to vector<2x128xf32>
    %c5 = arith.constant 5 : index
    %c0_20 = arith.constant 0 : index
    %c0_21 = arith.constant 0 : index
    %29 = vector.load %arg1[%c5, %c0_20, %c0_21] : memref<9x2x128xf32, #tpu.memory_space<vmem>>, vector<1x2x128xf32>
    %30 = vector.shape_cast %29 : vector<1x2x128xf32> to vector<2x128xf32>
    %c3_22 = arith.constant 3 : index
    %c0_23 = arith.constant 0 : index
    %c0_24 = arith.constant 0 : index
    %31 = vector.load %arg2[%c3_22, %c0_23, %c0_24] : memref<9x2x128xf32, #tpu.memory_space<vmem>>, vector<1x2x128xf32>
    %32 = vector.shape_cast %31 : vector<1x2x128xf32> to vector<2x128xf32>
    %c4_25 = arith.constant 4 : index
    %c0_26 = arith.constant 0 : index
    %c0_27 = arith.constant 0 : index
    %33 = vector.load %arg2[%c4_25, %c0_26, %c0_27] : memref<9x2x128xf32, #tpu.memory_space<vmem>>, vector<1x2x128xf32>
    %34 = vector.shape_cast %33 : vector<1x2x128xf32> to vector<2x128xf32>
    %c5_28 = arith.constant 5 : index
    %c0_29 = arith.constant 0 : index
    %c0_30 = arith.constant 0 : index
    %35 = vector.load %arg2[%c5_28, %c0_29, %c0_30] : memref<9x2x128xf32, #tpu.memory_space<vmem>>, vector<1x2x128xf32>
    %36 = vector.shape_cast %35 : vector<1x2x128xf32> to vector<2x128xf32>
    %37 = arith.mulf %26, %32 : vector<2x128xf32>
    %38 = arith.mulf %28, %34 : vector<2x128xf32>
    %39 = arith.addf %37, %38 : vector<2x128xf32>
    %40 = arith.mulf %30, %36 : vector<2x128xf32>
    %41 = arith.addf %39, %40 : vector<2x128xf32>
    %42 = arith.mulf %26, %26 : vector<2x128xf32>
    %43 = arith.mulf %28, %28 : vector<2x128xf32>
    %44 = arith.addf %42, %43 : vector<2x128xf32>
    %45 = arith.mulf %30, %30 : vector<2x128xf32>
    %46 = arith.addf %44, %45 : vector<2x128xf32>
    %47 = arith.mulf %32, %32 : vector<2x128xf32>
    %48 = arith.mulf %34, %34 : vector<2x128xf32>
    %49 = arith.addf %47, %48 : vector<2x128xf32>
    %50 = arith.mulf %36, %36 : vector<2x128xf32>
    %51 = arith.addf %49, %50 : vector<2x128xf32>
    %cst_31 = arith.constant 1.000000e-16 : f32
    %52 = vector.broadcast %cst_31 : f32 to vector<2x128xf32>
    %53 = arith.maximumf %46, %52 : vector<2x128xf32>
    %54 = math.rsqrt %53 : vector<2x128xf32>
    %55 = arith.mulf %41, %54 : vector<2x128xf32>
    %cst_32 = arith.constant 1.000000e-16 : f32
    %56 = vector.broadcast %cst_32 : f32 to vector<2x128xf32>
    %57 = arith.maximumf %51, %56 : vector<2x128xf32>
    %58 = math.rsqrt %57 : vector<2x128xf32>
    %59 = arith.mulf %55, %58 : vector<2x128xf32>
    %60 = vector.shape_cast %59 : vector<2x128xf32> to vector<1x2x128xf32>
    %cst_33 = arith.constant dense<0.000000e+00> : vector<1xf32>
    %61 = vector.multi_reduction <add>, %60, %cst_33 [1, 2] : vector<1x2x128xf32> to vector<1xf32>
    %62 = vector.shape_cast %61 : vector<1xf32> to vector<1x1x1xf32>
    %63 = vector.extract %62[0, 0, 0] : f32 from vector<1x1x1xf32>
    %cst_34 = arith.constant 0.0119047621 : f32
    %64 = arith.mulf %63, %cst_34 : f32
    %c6 = arith.constant 6 : index
    %c0_35 = arith.constant 0 : index
    %c0_36 = arith.constant 0 : index
    %65 = vector.load %arg1[%c6, %c0_35, %c0_36] : memref<9x2x128xf32, #tpu.memory_space<vmem>>, vector<1x2x128xf32>
    %66 = vector.shape_cast %65 : vector<1x2x128xf32> to vector<2x128xf32>
    %c6_37 = arith.constant 6 : index
    %c0_38 = arith.constant 0 : index
    %c0_39 = arith.constant 0 : index
    %67 = vector.load %arg2[%c6_37, %c0_38, %c0_39] : memref<9x2x128xf32, #tpu.memory_space<vmem>>, vector<1x2x128xf32>
    %68 = vector.shape_cast %67 : vector<1x2x128xf32> to vector<2x128xf32>
    %69 = arith.subf %66, %68 : vector<2x128xf32>
    %c7 = arith.constant 7 : index
    %c0_40 = arith.constant 0 : index
    %c0_41 = arith.constant 0 : index
    %70 = vector.load %arg1[%c7, %c0_40, %c0_41] : memref<9x2x128xf32, #tpu.memory_space<vmem>>, vector<1x2x128xf32>
    %71 = vector.shape_cast %70 : vector<1x2x128xf32> to vector<2x128xf32>
    %c7_42 = arith.constant 7 : index
    %c0_43 = arith.constant 0 : index
    %c0_44 = arith.constant 0 : index
    %72 = vector.load %arg2[%c7_42, %c0_43, %c0_44] : memref<9x2x128xf32, #tpu.memory_space<vmem>>, vector<1x2x128xf32>
    %73 = vector.shape_cast %72 : vector<1x2x128xf32> to vector<2x128xf32>
    %74 = arith.subf %71, %73 : vector<2x128xf32>
    %c8 = arith.constant 8 : index
    %c0_45 = arith.constant 0 : index
    %c0_46 = arith.constant 0 : index
    %75 = vector.load %arg1[%c8, %c0_45, %c0_46] : memref<9x2x128xf32, #tpu.memory_space<vmem>>, vector<1x2x128xf32>
    %76 = vector.shape_cast %75 : vector<1x2x128xf32> to vector<2x128xf32>
    %c8_47 = arith.constant 8 : index
    %c0_48 = arith.constant 0 : index
    %c0_49 = arith.constant 0 : index
    %77 = vector.load %arg2[%c8_47, %c0_48, %c0_49] : memref<9x2x128xf32, #tpu.memory_space<vmem>>, vector<1x2x128xf32>
    %78 = vector.shape_cast %77 : vector<1x2x128xf32> to vector<2x128xf32>
    %79 = arith.subf %76, %78 : vector<2x128xf32>
    %80 = arith.mulf %69, %69 : vector<2x128xf32>
    %81 = arith.mulf %74, %74 : vector<2x128xf32>
    %82 = arith.addf %80, %81 : vector<2x128xf32>
    %83 = arith.mulf %79, %79 : vector<2x128xf32>
    %84 = arith.addf %82, %83 : vector<2x128xf32>
    %85 = vector.shape_cast %84 : vector<2x128xf32> to vector<1x2x128xf32>
    %cst_50 = arith.constant dense<0.000000e+00> : vector<1xf32>
    %86 = vector.multi_reduction <add>, %85, %cst_50 [1, 2] : vector<1x2x128xf32> to vector<1xf32>
    %87 = vector.shape_cast %86 : vector<1xf32> to vector<1x1x1xf32>
    %88 = vector.extract %87[0, 0, 0] : f32 from vector<1x1x1xf32>
    %cst_51 = arith.constant 0.0039682542 : f32
    %89 = arith.mulf %88, %cst_51 : f32
    %c0_52 = arith.constant 0 : index
    %c0_53 = arith.constant 0 : index
    %90 = vector.load %arg3[%c0_52, %c0_53] : memref<2x32xf32, #tpu.memory_space<vmem>>, vector<2x32xf32>
    %c0_54 = arith.constant 0 : index
    %c0_55 = arith.constant 0 : index
    %91 = vector.load %arg4[%c0_54, %c0_55] : memref<2x32xf32, #tpu.memory_space<vmem>>, vector<2x32xf32>
    %cst_56 = arith.constant 1.000000e+00 : f32
    %92 = vector.broadcast %cst_56 : f32 to vector<2x32xf32>
    %93 = arith.addf %92, %91 : vector<2x32xf32>
    %94 = arith.mulf %90, %90 : vector<2x32xf32>
    %95 = arith.subf %93, %94 : vector<2x32xf32>
    %96 = math.exp %91 : vector<2x32xf32>
    %97 = arith.subf %95, %96 : vector<2x32xf32>
    %98 = vector.shape_cast %97 : vector<2x32xf32> to vector<1x2x32xf32>
    %cst_57 = arith.constant dense<0.000000e+00> : vector<1xf32>
    %99 = vector.multi_reduction <add>, %98, %cst_57 [1, 2] : vector<1x2x32xf32> to vector<1xf32>
    %100 = vector.shape_cast %99 : vector<1xf32> to vector<1x1x1xf32>
    %101 = vector.extract %100[0, 0, 0] : f32 from vector<1x1x1xf32>
    %cst_58 = arith.constant 6.400000e+01 : f32
    %102 = arith.divf %101, %cst_58 : f32
    %cst_59 = arith.constant -5.000000e-01 : f32
    %103 = arith.mulf %cst_59, %102 : f32
    %c0_i32 = arith.constant 0 : i32
    %104 = arith.cmpi eq, %arg0, %c0_i32 : i32
    %cst_60 = arith.constant 0.000000e+00 : f32
    %105 = arith.select %104, %103, %cst_60 : f32
    %106 = tpu.iota {dimensions = array<i32: 0>} : vector<4x128xi32>
    %c0_i32_61 = arith.constant 0 : i32
    %107 = vector.broadcast %c0_i32_61 : i32 to vector<4x128xi32>
    %108 = arith.cmpi eq, %106, %107 : vector<4x128xi32>
    %c1_i32 = arith.constant 1 : i32
    %109 = vector.broadcast %c1_i32 : i32 to vector<4x128xi32>
    %110 = arith.cmpi eq, %106, %109 : vector<4x128xi32>
    %c2_i32 = arith.constant 2 : i32
    %111 = vector.broadcast %c2_i32 : i32 to vector<4x128xi32>
    %112 = arith.cmpi eq, %106, %111 : vector<4x128xi32>
    %113 = vector.broadcast %89 : f32 to vector<4x128xf32>
    %114 = vector.broadcast %105 : f32 to vector<4x128xf32>
    %115 = arith.select %112, %113, %114 : vector<4x128xi1>, vector<4x128xf32>
    %116 = vector.broadcast %64 : f32 to vector<4x128xf32>
    %117 = arith.select %110, %116, %115 : vector<4x128xi1>, vector<4x128xf32>
    %118 = vector.broadcast %24 : f32 to vector<4x128xf32>
    %119 = arith.select %108, %118, %117 : vector<4x128xi1>, vector<4x128xf32>
    %c0_62 = arith.constant 0 : index
    %c0_63 = arith.constant 0 : index
    %c0_64 = arith.constant 0 : index
    %120 = vector.load %arg5[%c0_62, %c0_63, %c0_64] : memref<1x4x128xf32, #tpu.memory_space<vmem>>, vector<1x4x128xf32>
    %121 = vector.shape_cast %120 : vector<1x4x128xf32> to vector<4x128xf32>
    %122 = vector.shape_cast %119 : vector<4x128xf32> to vector<1x4x128xf32>
    tpu.vector_store %arg5[%c0_62, %c0_63, %c0_64], %122 {strides = array<i32>} : memref<1x4x128xf32, #tpu.memory_space<vmem>>, vector<1x4x128xf32>,
    return
  }
  func.func @transform_0(%arg0: i32) -> (i32, i32, i32) {
    %c0_i32 = arith.constant 0 : i32
    %c0_i32_0 = arith.constant 0 : i32
    %c0_i32_1 = arith.constant 0 : i32
    return %c0_i32, %c0_i32_0, %arg0 : i32, i32, i32
  }
  func.func @transform_1(%arg0: i32) -> (i32, i32, i32) {
    %c0_i32 = arith.constant 0 : i32
    %c0_i32_0 = arith.constant 0 : i32
    %c0_i32_1 = arith.constant 0 : i32
    return %c0_i32, %c0_i32_0, %arg0 : i32, i32, i32
  }
  func.func @transform_2(%arg0: i32) -> (i32, i32) {
    %c0_i32 = arith.constant 0 : i32
    %c0_i32_0 = arith.constant 0 : i32
    %c0_i32_1 = arith.constant 0 : i32
    return %c0_i32, %c0_i32_0 : i32, i32
  }
  func.func @transform_3(%arg0: i32) -> (i32, i32) {
    %c0_i32 = arith.constant 0 : i32
    %c0_i32_0 = arith.constant 0 : i32
    %c0_i32_1 = arith.constant 0 : i32
    return %c0_i32, %c0_i32_0 : i32, i32
  }
  func.func @transform_4(%arg0: i32) -> (i32, i32, i32) {
    %c0_i32 = arith.constant 0 : i32
    %c0_i32_0 = arith.constant 0 : i32
    %c0_i32_1 = arith.constant 0 : i32
    return %arg0, %c0_i32, %c0_i32_0 : i32, i32, i32
  }
}

</mosaic_0001>

<llo_original>
// kernel: p2pkld_loss.1
$region0: #{p2pkld_loss.1}
  #allocation0 [shape = 'u32[]', space=smem, size = 0x4, offset = 0x4, fixed_abs, tag = 'smem constant byte address 0x4 - core index']
  #allocation1 [shape = 'u32[144,128]{1,0:T(1,128)}', space=vmem, size = 0x12000, scoped, tag = 'internal scratch']
  %s0 = inlined_call_operand.vmem [shape: f32[9,2,128], index: 0, kind: input, shape index: {}]
  %s1 = inlined_call_operand.vmem [shape: f32[9,2,128], index: 1, kind: input, shape index: {}]
  %s2 = inlined_call_operand.vmem [shape: f32[2,32], index: 2, kind: input, shape index: {}]
  %s3 = inlined_call_operand.vmem [shape: f32[2,32], index: 3, kind: input, shape index: {}]
  %s4 = inlined_call_operand.vmem [shape: f32[1,4,128], index: 4, kind: output, shape index: {}]
  %s5 = sld [smem:[#allocation0]]
  $region26: #{p2pkld_loss.1} parent=0
    _
  %s7 = ssub.s32 1, %s5
  %s8 = scalar_select 0, %s7, %s5
  // Predicated region
  $region2: #{p2pkld_loss.1} parent=0 // pred_check
    _
  $region3: #{p2pkld_loss.1} parent=0 // pred_check_branch
    %10 = sbr.rel (0) target = $region5
  $region4: #{p2pkld_loss.1} parent=0 // pred_region
    _
  $region5: #{p2pkld_loss.1} parent=0 // pred_fallthru
    _
  // Predicated region
  $region6: #{p2pkld_loss.1} parent=0 // pred_check
    _
  $region7: #{p2pkld_loss.1} parent=0 // pred_check_branch
    %12 = sbr.rel (0) target = $region9
  $region8: #{p2pkld_loss.1} parent=0 // pred_region
    _
  $region9: #{p2pkld_loss.1} parent=0 // pred_fallthru
    _
  // Predicated region
  $region10: #{p2pkld_loss.1} parent=0 // pred_check
    _
  $region11: #{p2pkld_loss.1} parent=0 // pred_check_branch
    %14 = sbr.rel (0) target = $region13
  $region12: #{p2pkld_loss.1} parent=0 // pred_region
    _
  $region13: #{p2pkld_loss.1} parent=0 // pred_fallthru
    _
  // Predicated region
  $region14: #{p2pkld_loss.1} parent=0 // pred_check
    _
  $region15: #{p2pkld_loss.1} parent=0 // pred_check_branch
    %16 = sbr.rel (0) target = $region17
  $region16: #{p2pkld_loss.1} parent=0 // pred_region
    _
  $region17: #{p2pkld_loss.1} parent=0 // pred_fallthru
    _
  %v17 = vld [vmem:[%s0] sm:$0x3]
  %v18 = vld [vmem:[%s1] sm:$0x3]
  %v19 = vsub.f32 %v17, %v18
  %s20 = scalar_lea.vmem %s0, 2
  %v21 = vld [vmem:[%s20] sm:$0x3]
  %s22 = scalar_lea.vmem %s1, 2
  %v23 = vld [vmem:[%s22] sm:$0x3]
  %v24 = vsub.f32 %v21, %v23
  %s25 = scalar_lea.vmem %s0, 4
  %v26 = vld [vmem:[%s25] sm:$0x3]
  %s27 = scalar_lea.vmem %s1, 4
  %v28 = vld [vmem:[%s27] sm:$0x3]
  %v29 = vsub.f32 %v26, %v28
  %v30 = vmul.f32 %v19, %v19
  %v31 = vmul.f32 %v24, %v24
  %v32 = vadd.f32 %v30, %v31
  %v33 = vmul.f32 %v29, %v29
  %v34 = vadd.f32 %v32, %v33
  %vm35 = vcmask 1041408
  %v36 = vsel %vm35, %v34, 0.0
  %37 = vadd.xlane.f32.xlu0 %v36
  %v38 = vpop.xlane.xlu0 %37
  %v39 = vrot.slane %v38, 4
  %v40 = vadd.f32 %v38, %v39
  %v41 = vrot.slane %v40, 2
  %v42 = vadd.f32 %v40, %v41
  %v43 = vrot.slane %v42, 1
  %v44 = vadd.f32 %v42, %v43
  %s45 = vtos %v44
  %s46 = smul.f32 %s45, 0.003968254
  %s47 = scalar_lea.vmem %s0, 6
  %v48 = vld [vmem:[%s47] sm:$0x3]
  %s49 = scalar_lea.vmem %s0, 8
  %v50 = vld [vmem:[%s49] sm:$0x3]
  %s51 = scalar_lea.vmem %s0, 10
  %v52 = vld [vmem:[%s51] sm:$0x3]
  %s53 = scalar_lea.vmem %s1, 6
  %v54 = vld [vmem:[%s53] sm:$0x3]
  %s55 = scalar_lea.vmem %s1, 8
  %v56 = vld [vmem:[%s55] sm:$0x3]
  %s57 = scalar_lea.vmem %s1, 10
  %v58 = vld [vmem:[%s57] sm:$0x3]
  %v59 = vmul.f32 %v48, %v54
  %v60 = vmul.f32 %v50, %v56
  %v61 = vadd.f32 %v59, %v60
  %v62 = vmul.f32 %v52, %v58
  %v63 = vadd.f32 %v61, %v62
  %v64 = vmul.f32 %v48, %v48
  %v65 = vmul.f32 %v50, %v50
  %v66 = vadd.f32 %v64, %v65
  %v67 = vmul.f32 %v52, %v52
  %v68 = vadd.f32 %v66, %v67
  %v69 = vmul.f32 %v54, %v54
  %v70 = vmul.f32 %v56, %v56
  %v71 = vadd.f32 %v69, %v70
  %v72 = vmul.f32 %v58, %v58
  %v73 = vadd.f32 %v71, %v72
  %v74 = vmax.f32 %v68, 1e-16
  %v75 = vrsqrt.pop %v74
  %v76 = vmul.f32 %v63, %v75
  %v77 = vmax.f32 %v73, 1e-16
  %v78 = vrsqrt.pop %v77
  %v79 = vmul.f32 %v76, %v78
  %v80 = vsel %vm35, %v79, 0.0
  %81 = vadd.xlane.f32.xlu0 %v80
  %v82 = vpop.xlane.xlu0 %81
  %v83 = vrot.slane %v82, 4
  %v84 = vadd.f32 %v82, %v83
  %v85 = vrot.slane %v84, 2
  %v86 = vadd.f32 %v84, %v85
  %v87 = vrot.slane %v86, 1
  %v88 = vadd.f32 %v86, %v87
  %s89 = vtos %v88
  %s90 = smul.f32 %s89, 0.011904762
  %s91 = scalar_lea.vmem %s0, 12
  %v92 = vld [vmem:[%s91] sm:$0x3]
  %s93 = scalar_lea.vmem %s1, 12
  %v94 = vld [vmem:[%s93] sm:$0x3]
  %v95 = vsub.f32 %v92, %v94
  %s96 = scalar_lea.vmem %s0, 14
  %v97 = vld [vmem:[%s96] sm:$0x3]
  %s98 = scalar_lea.vmem %s1, 14
  %v99 = vld [vmem:[%s98] sm:$0x3]
  %v100 = vsub.f32 %v97, %v99
  %s101 = scalar_lea.vmem %s0, 16
  %v102 = vld [vmem:[%s101] sm:$0x3]
  %s103 = scalar_lea.vmem %s1, 16
  %v104 = vld [vmem:[%s103] sm:$0x3]
  %v105 = vsub.f32 %v102, %v104
  %v106 = vmul.f32 %v95, %v95
  %v107 = vmul.f32 %v100, %v100
  %v108 = vadd.f32 %v106, %v107
  %v109 = vmul.f32 %v105, %v105
  %v110 = vadd.f32 %v108, %v109
  %v111 = vsel %vm35, %v110, 0.0
  %112 = vadd.xlane.f32.xlu0 %v111
  %v113 = vpop.xlane.xlu0 %112
  %v114 = vrot.slane %v113, 4
  %v115 = vadd.f32 %v113, %v114
  %v116 = vrot.slane %v115, 2
  %v117 = vadd.f32 %v115, %v116
  %v118 = vrot.slane %v117, 1
  %v119 = vadd.f32 %v117, %v118
  %s120 = vtos %v119
  %s121 = smul.f32 %s120, 0.003968254
  %v122 = vld [vmem:[%s2] sm:$0x3]
  %v123 = vld [vmem:[%s3] sm:$0x3]
  %v124 = vadd.f32 %v123, 1.0
  %v125 = vmul.f32 %v122, %v122
  %v126 = vsub.f32 %v124, %v125
  %v127 = vmul.f32 %v123, 1.442695
  %v128 = vpow.pop %v127
  %v129 = vsub.f32 %v126, %v128
  %vm130 = vcmask 254976
  %v131 = vsel %vm130, %v129, 0.0
  %132 = vadd.xlane.f32.xlu0 %v131
  %v133 = vpop.xlane.xlu0 %132
  %v134 = vrot.slane %v133, 4
  %v135 = vadd.f32 %v133, %v134
  %v136 = vrot.slane %v135, 2
  %v137 = vadd.f32 %v135, %v136
  %v138 = vrot.slane %v137, 1
  %v139 = vadd.f32 %v137, %v138
  %s140 = vtos %v139
  %v141 = vrcp.pop 64.0
  %s142 = vtos %v141
  %s143 = smul.f32 %s140, %s142
  %s144 = smul.f32 %s143, -0.5
  %p145 = scmp.eq.s32.totalorder 0, 0
  %s146 = scalar_select %p145, %s144, 0.0
  %v147 = vlaneseq
  %v148 = vshrl.u32 %v147, 7
  %vm149 = vcmp.eq.s32.totalorder %v148, 0
  %vm150 = vcmp.eq.s32.totalorder %v148, 1
  %vm151 = vcmp.eq.s32.totalorder %v148, 2
  %v152 = vstv %s121
  %v153 = vstv %s146
  %v154 = vsel %vm151, %v152, %v153
  %v155 = vstv %s90
  %v156 = vsel %vm150, %v155, %v154
  %v157 = vstv %s46
  %v158 = vsel %vm149, %v157, %v156
  %159 = vst [vmem:[%s4] sm:$0xf] %v158
  // Predicated region
  $region18: #{p2pkld_loss.1} parent=0 // pred_check
    _
  $region19: #{p2pkld_loss.1} parent=0 // pred_check_branch
    %161 = sbr.rel (0) target = $region21
  $region20: #{p2pkld_loss.1} parent=0 // pred_region
    _
  $region21: #{p2pkld_loss.1} parent=0 // pred_fallthru
    _
  // Predicated region
  $region22: #{p2pkld_loss.1} parent=0 // pred_check
    _
  $region23: #{p2pkld_loss.1} parent=0 // pred_check_branch
    %163 = sbr.rel (0) target = $region25
  $region24: #{p2pkld_loss.1} parent=0 // pred_region
    _
  $region25: #{p2pkld_loss.1} parent=0 // pred_fallthru
    _

</llo_original>
